<compile_context>
chip_gen: v7x
topology: tpu7x:2x2x1
jax: 0.10.0
libtpu: 0.0.40
codegen_flags: <defaults>
</compile_context>

<pallas_src>
import jax
import jax.numpy as jnp
from jax.experimental import pallas as pl
from jax.experimental.pallas import tpu as pltpu


def _round_up(x, m):
    return (x + m - 1) // m * m


def _choose_tile(dim, max_tile, gran):
    """Pick a tile (multiple of `gran`, <= max_tile) that minimizes the padding
    of `dim`, preferring larger tiles on ties.  Returns (tile, padded_dim)."""
    dim_g = _round_up(dim, gran)
    limit = min(max_tile, dim_g)
    best_tile = gran
    best_pad = dim_g - dim
    t = gran
    while t <= limit:
        pad = _round_up(dim, t) - dim
        if pad <= best_pad:          # '<=' prefers the larger tile on ties
            best_pad = pad
            best_tile = t
        t += gran
    return best_tile, _round_up(dim, best_tile)


def _vmem_limit_bytes():
    """Scoped-VMEM limit derived from the actual chip (v7x has 64 MiB/TC)."""
    try:
        cap = pltpu.get_tpu_info().vmem_capacity_bytes
        return int(min(cap * 3 // 4, 100 * 1024 * 1024))
    except Exception:
        return 64 * 1024 * 1024


def _num_tensorcores():
    try:
        return int(getattr(jax.devices()[0], "num_cores", 1)) or 1
    except Exception:
        return 1


# ----------------------------------------------------------------------------
# Kernels
# ----------------------------------------------------------------------------

def _linear_kernel_inplace(x_ref, wt_ref, b_ref, o_ref):
    """f32 output: accumulate directly into the resident output block.
    No scratch, no final copy; bias is the k==0 initializer."""
    k = pl.program_id(2)

    @pl.when(k == 0)
    def _():
        o_ref[...] = jnp.broadcast_to(b_ref[...], o_ref.shape).astype(o_ref.dtype)

    o_ref[...] += jnp.dot(x_ref[...], wt_ref[...],
                          preferred_element_type=jnp.float32)


def _linear_kernel_acc(x_ref, wt_ref, b_ref, o_ref, acc_ref):
    """Narrow output dtypes: f32 scratch accumulator, cast on the last K step."""
    k = pl.program_id(2)

    @pl.when(k == 0)
    def _():
        acc_ref[...] = jnp.broadcast_to(b_ref[...], acc_ref.shape).astype(jnp.float32)

    acc_ref[...] += jnp.dot(x_ref[...], wt_ref[...],
                            preferred_element_type=jnp.float32)

    @pl.when(k == pl.num_programs(2) - 1)
    def _():
        o_ref[...] = acc_ref[...].astype(o_ref.dtype)


# ----------------------------------------------------------------------------
# Wrapper
# ----------------------------------------------------------------------------

def prepare_linear_params(weight, bias, *, tn_max=1024, tk_max=1024,
                          compute_dtype=None):
    """One-time layout work (call OUTSIDE the jitted hot path):
      * weight (D_out, D_in) -> padded (K_p, N_p) = W^T in MXU-RHS layout
      * bias   (D_out,)      -> padded (1, N_p), kept in f32
      * choose lane-granular tiles tk / tn that divide the padded dims.
    """
    D_out, D_in = weight.shape

    tk, K_p = _choose_tile(D_in, tk_max, 128)
    tn, N_p = _choose_tile(D_out, tn_max, 128)

    # v7x megacore: keep >=2 blocks along a parallel axis so neither TC idles.
    if _num_tensorcores() >= 2 and N_p // tn < 2 and N_p >= 256:
        tn_cap = max(128, (N_p // 2) // 128 * 128)
        tn, N_p = _choose_tile(D_out, tn_cap, 128)

    w_dtype = compute_dtype if compute_dtype is not None else weight.dtype
    wt_p = jnp.pad(weight.T.astype(w_dtype),
                   ((0, K_p - D_in), (0, N_p - D_out)))
    b_p = jnp.pad(bias.astype(jnp.float32).reshape(1, D_out),
                  ((0, 0), (0, N_p - D_out)))

    return {
        "wt_p": wt_p, "b_p": b_p,
        "tk": tk, "tn": tn,
        "d_in": D_in, "d_out": D_out,
        "compute_dtype": compute_dtype,
    }


def linear_apply(x, params, *, tm_max=256):
    """y = x @ W.T + b using pre-prepared (transposed/padded) weight params."""
    wt_p, b_p = params["wt_p"], params["b_p"]
    tk, tn = params["tk"], params["tn"]
    D_in, D_out = params["d_in"], params["d_out"]
    compute_dtype = params["compute_dtype"]

    B = x.shape[0]
    out_dtype = x.dtype
    K_p, N_p = wt_p.shape

    tm, B_p = _choose_tile(B, tm_max, 8)

    if compute_dtype is not None:
        x = x.astype(compute_dtype)
    # Activation pad: at most 127 K columns / (tm-1) rows thanks to
    # granularity-based padding (this is the only per-call layout work left).
    x_p = jnp.pad(x, ((0, B_p - B), (0, K_p - D_in)))

    grid = (B_p // tm, N_p // tn, K_p // tk)
    grid_m, grid_n, _ = grid

    flops = 2 * B_p * K_p * N_p
    bytes_accessed = int(
        x_p.size * x_p.dtype.itemsize * grid_n       # x re-read per N tile
        + wt_p.size * wt_p.dtype.itemsize * grid_m   # W re-read per M tile
        + b_p.size * b_p.dtype.itemsize * grid_m
        + B_p * N_p * jnp.dtype(out_dtype).itemsize)

    use_inplace = jnp.dtype(out_dtype) == jnp.dtype(jnp.float32)
    kernel = _linear_kernel_inplace if use_inplace else _linear_kernel_acc
    scratch = [] if use_inplace else [pltpu.VMEM((tm, tn), jnp.float32)]

    out_p = pl.pallas_call(
        kernel,
        out_shape=jax.ShapeDtypeStruct((B_p, N_p), out_dtype),
        grid_spec=pltpu.PrefetchScalarGridSpec(
            num_scalar_prefetch=0,
            grid=grid,
            in_specs=[
                pl.BlockSpec((tm, tk), lambda i, j, k: (i, k)),   # x tile
                pl.BlockSpec((tk, tn), lambda i, j, k: (k, j)),   # W^T tile
                pl.BlockSpec((1, tn), lambda i, j, k: (0, j)),    # bias tile
            ],
            out_specs=pl.BlockSpec((tm, tn), lambda i, j, k: (i, j)),
            scratch_shapes=scratch,
        ),
        compiler_params=pltpu.CompilerParams(
            dimension_semantics=("parallel", "parallel", "arbitrary"),
            vmem_limit_bytes=_vmem_limit_bytes(),
        ),
        cost_estimate=pl.CostEstimate(
            flops=flops, transcendentals=0, bytes_accessed=bytes_accessed),
    )(x_p, wt_p, b_p)

    return out_p[:B, :D_out]


def linear_model(x, weight, bias, *, compute_dtype=None,
                 tm_max=256, tn_max=1024, tk_max=1024):
    """One-shot convenience. For repeated calls, hoist prepare_linear_params()
    out of the hot loop and reuse the returned params."""
    params = prepare_linear_params(weight, bias, tn_max=tn_max, tk_max=tk_max,
                                   compute_dtype=compute_dtype)
    return linear_apply(x, params, tm_max=tm_max)


if __name__ == "__main__":
    # Shapes implied by the module: config.model.input_dim / output_dim.
    batch, input_dim, output_dim = 8, 32, 16

    key = jax.random.PRNGKey(0)
    kx, kw, kb = jax.random.split(key, 3)

    x = jax.random.normal(kx, (batch, input_dim), dtype=jnp.float32)
    # Deterministic init mimicking nn.Linear's uniform(-1/sqrt(fan_in), ...).
    bound = 1.0 / (input_dim ** 0.5)
    weight = jax.random.uniform(
        kw, (output_dim, input_dim), minval=-bound, maxval=bound,
        dtype=jnp.float32)
    bias = jax.random.uniform(
        kb, (output_dim,), minval=-bound, maxval=bound, dtype=jnp.float32)

    ref = x @ weight.T + bias

    # --- f32 path: prep hoisted outside the jitted hot path --------------
    params = prepare_linear_params(weight, bias)
    apply_fn = jax.jit(lambda xx: linear_apply(xx, params))
    out = jax.block_until_ready(apply_fn(x))
    assert out.shape == (batch, output_dim)
    assert jnp.allclose(out, ref, atol=1e-5, rtol=1e-5)

    # --- optional bf16-operand path (f32 accumulation) -------------------
    params_bf16 = prepare_linear_params(weight, bias, compute_dtype=jnp.bfloat16)
    out_bf16 = jax.block_until_ready(linear_apply(x, params_bf16))
    assert out_bf16.shape == (batch, output_dim)
    assert jnp.allclose(out_bf16, ref, atol=1e-1, rtol=1e-1)

    print("KERNEL_OK")
</pallas_src>

<mosaic_0001>
module attributes {stable_mosaic.version = 11 : i64} {
  func.func @_linear_kernel_inplace(%arg0: i32, %arg1: i32, %arg2: i32, %arg3: memref<8x128xf32, #tpu.memory_space<vmem>>, %arg4: memref<128x128xf32, #tpu.memory_space<vmem>>, %arg5: memref<1x128xf32, #tpu.memory_space<vmem>>, %arg6: memref<8x128xf32, #tpu.memory_space<vmem>>) attributes {dimension_semantics = [#tpu.dimension_semantics<parallel>, #tpu.dimension_semantics<parallel>, #tpu.dimension_semantics<arbitrary>], iteration_bounds = array<i64: 1, 1, 1>, scalar_prefetch = 0 : i64, scratch_operands = 0 : i64, tpu.core_type = #tpu.core_type<tc>, window_params = [{transform_indices = @transform_0, window_bounds = array<i64: 8, 128>}, {transform_indices = @transform_1, window_bounds = array<i64: 128, 128>}, {transform_indices = @transform_2, window_bounds = array<i64: 1, 128>}, {transform_indices = @transform_3, window_bounds = array<i64: 8, 128>}]} {
    %c0_i32 = arith.constant 0 : i32
    %0 = arith.cmpi eq, %arg2, %c0_i32 : i32
    %1 = arith.extui %0 : i1 to i32
    %c0_i32_0 = arith.constant 0 : i32
    %2 = arith.cmpi ne, %1, %c0_i32_0 : i32
    scf.if %2 {
      %c0_8 = arith.constant 0 : index
      %c0_9 = arith.constant 0 : index
      %9 = vector.load %arg5[%c0_8, %c0_9] : memref<1x128xf32, #tpu.memory_space<vmem>>, vector<1x128xf32>
      %10 = vector.shape_cast %9 : vector<1x128xf32> to vector<1x128xf32>
      %11 = vector.broadcast %10 : vector<1x128xf32> to vector<8x128xf32>
      %c0_10 = arith.constant 0 : index
      %c0_11 = arith.constant 0 : index
      %12 = vector.load %arg6[%c0_10, %c0_11] : memref<8x128xf32, #tpu.memory_space<vmem>>, vector<8x128xf32>
      tpu.vector_store %arg6[%c0_10, %c0_11], %11 {strides = array<i32>} : memref<8x128xf32, #tpu.memory_space<vmem>>, vector<8x128xf32>,
    } else {
    }
    %c0 = arith.constant 0 : index
    %c0_1 = arith.constant 0 : index
    %3 = vector.load %arg6[%c0, %c0_1] : memref<8x128xf32, #tpu.memory_space<vmem>>, vector<8x128xf32>
    %c0_2 = arith.constant 0 : index
    %c0_3 = arith.constant 0 : index
    %4 = vector.load %arg3[%c0_2, %c0_3] : memref<8x128xf32, #tpu.memory_space<vmem>>, vector<8x128xf32>
    %c0_4 = arith.constant 0 : index
    %c0_5 = arith.constant 0 : index
    %5 = vector.load %arg4[%c0_4, %c0_5] : memref<128x128xf32, #tpu.memory_space<vmem>>, vector<128x128xf32>
    %cst = arith.constant dense<0.000000e+00> : vector<8x128xf32>
    %6 = tpu.matmul %4, %5, %cst {dimension_numbers = #tpu.dot_dimension_numbers<[1], [0], [0], [1], [0, 0, 1, 1], [], []>} : vector<8x128xf32>, vector<128x128xf32>, vector<8x128xf32> -> vector<8x128xf32>
    %7 = arith.addf %3, %6 : vector<8x128xf32>
    %c0_6 = arith.constant 0 : index
    %c0_7 = arith.constant 0 : index
    %8 = vector.load %arg6[%c0_6, %c0_7] : memref<8x128xf32, #tpu.memory_space<vmem>>, vector<8x128xf32>
    tpu.vector_store %arg6[%c0_6, %c0_7], %7 {strides = array<i32>} : memref<8x128xf32, #tpu.memory_space<vmem>>, vector<8x128xf32>,
    return
  }
  func.func @transform_0(%arg0: i32, %arg1: i32, %arg2: i32) -> (i32, i32) {
    %c0_i32 = arith.constant 0 : i32
    return %arg0, %arg2 : i32, i32
  }
  func.func @transform_1(%arg0: i32, %arg1: i32, %arg2: i32) -> (i32, i32) {
    %c0_i32 = arith.constant 0 : i32
    return %arg2, %arg1 : i32, i32
  }
  func.func @transform_2(%arg0: i32, %arg1: i32, %arg2: i32) -> (i32, i32) {
    %c0_i32 = arith.constant 0 : i32
    %c0_i32_0 = arith.constant 0 : i32
    return %c0_i32, %arg1 : i32, i32
  }
  func.func @transform_3(%arg0: i32, %arg1: i32, %arg2: i32) -> (i32, i32) {
    %c0_i32 = arith.constant 0 : i32
    return %arg0, %arg1 : i32, i32
  }
}

</mosaic_0001>

<llo_original>
// kernel: _lambda_.1
$region0: #{_lambda_.1}
  #allocation0 [shape = 'u32[]', space=smem, size = 0x4, offset = 0x4, fixed_abs, tag = 'smem constant byte address 0x4 - core index']
  #allocation1 [shape = 'u32[144,128]{1,0:T(1,128)}', space=vmem, size = 0x12000, scoped, tag = 'internal scratch']
  %s0 = inlined_call_operand.hbm [shape: f32[8,128], index: 0, kind: input, shape index: {}]
  %s1 = inlined_call_operand.hbm [shape: f32[128,128], index: 1, kind: input, shape index: {}]
  %s2 = inlined_call_operand.hbm [shape: f32[1,128], index: 2, kind: input, shape index: {}]
  %s3 = inlined_call_operand.hbm [shape: f32[8,128], index: 3, kind: output, shape index: {}]
  %s4 = sld [smem:[#allocation0]]
  $region38: #{_lambda_.1} parent=0
    _
  %s6 = ssub.s32 1, %s4
  %s7 = scalar_select 0, %s6, %s4
  $region1: #{_lambda_.1} parent=0
    #allocation2 [shape = 'u8[4096]{0}', space=vmem, size = 0x1000, scoped, tag = 'input window, operand 0, single buffered']
    #allocation3 [shape = 's32[1]{0}', space=sflag, size = 0x4, scoped, tag = 'scoped memory for _lambda_.1']
    #allocation4 [shape = 's32[1]{0}', space=sflag, size = 0x4, scoped, tag = 'scoped memory for _lambda_.1']
    #allocation5 [shape = 'u8[65536]{0}', space=vmem, size = 0x10000, scoped, tag = 'input window, operand 1, single buffered']
    #allocation6 [shape = 's32[1]{0}', space=sflag, size = 0x4, scoped, tag = 'scoped memory for _lambda_.1']
    #allocation7 [shape = 'u8[512]{0}', space=vmem, size = 0x400, scoped, tag = 'input window, operand 2, single buffered']
    #allocation8 [shape = 'u8[4096]{0}', space=vmem, size = 0x1000, scoped, tag = 'output window, operand 0, single buffered']
    %8 = vsyncpa [#allocation3], 0
    %9 = vsyncpa [#allocation6], 0
    %10 = vsyncpa [#allocation4], 0
    // Predicated region
    $region2: #{_lambda_.1} parent=1 // pred_check
      _
    $region3: #{_lambda_.1} parent=1 // pred_check_branch
      %12 = sbr.rel (0) target = $region5
    $region4: #{_lambda_.1} parent=1 // pred_region
      %s14 = ssub.s32 128, 128
      %15 = vsyncadd [#allocation3], %s14
      %s17 = sshll.u32 [#allocation2], 4
      %s18 = int_to_ptr.vmem [resolvable:$true] %s17
      %20 = dma.hbm_to_vmem [thread:$0]  %s0, 128, %s18, [#allocation3]
    $region5: #{_lambda_.1} parent=1 // pred_fallthru
      _
    // Predicated region
    $region6: #{_lambda_.1} parent=1 // pred_check
      _
    $region7: #{_lambda_.1} parent=1 // pred_check_branch
      %22 = sbr.rel (0) target = $region9
    $region8: #{_lambda_.1} parent=1 // pred_region
      %s24 = ssub.s32 2048, 2048
      %25 = vsyncadd [#allocation6], %s24
      %s26 = sshll.u32 [#allocation5], 4
      %s27 = int_to_ptr.vmem [resolvable:$true] %s26
      %32 = dma.hbm_to_vmem [thread:$0]  %s1, 2048, %s27, [#allocation6], 128, 128, 8
    $region9: #{_lambda_.1} parent=1 // pred_fallthru
      _
    // Predicated region
    $region10: #{_lambda_.1} parent=1 // pred_check
      _
    $region11: #{_lambda_.1} parent=1 // pred_check_branch
      %34 = sbr.rel (0) target = $region13
    $region12: #{_lambda_.1} parent=1 // pred_region
      %s36 = ssub.s32 16, 16
      %37 = vsyncadd [#allocation6], %s36
      %s39 = sshll.u32 [#allocation7], 4
      %s40 = int_to_ptr.vmem [resolvable:$true] %s39
      %42 = dma.hbm_to_vmem [thread:$0]  %s2, 16, %s40, [#allocation6]
    $region13: #{_lambda_.1} parent=1 // pred_fallthru
      _
    // Predicated region
    $region14: #{_lambda_.1} parent=1 // pred_check
      _
    $region15: #{_lambda_.1} parent=1 // pred_check_branch
      %44 = sbr.rel (0) target = $region17
    $region16: #{_lambda_.1} parent=1 // pred_region
      %45 = dma.done [#allocation3], 128
    $region17: #{_lambda_.1} parent=1 // pred_fallthru
      _
    // Predicated region
    $region18: #{_lambda_.1} parent=1 // pred_check
      _
    $region19: #{_lambda_.1} parent=1 // pred_check_branch
      %47 = sbr.rel (0) target = $region21
    $region20: #{_lambda_.1} parent=1 // pred_region
      %48 = dma.done [#allocation6], 2048
    $region21: #{_lambda_.1} parent=1 // pred_fallthru
      _
    // Predicated region
    $region22: #{_lambda_.1} parent=1 // pred_check
      _
    $region23: #{_lambda_.1} parent=1 // pred_check_branch
      %50 = sbr.rel (0) target = $region25
    $region24: #{_lambda_.1} parent=1 // pred_region
      %51 = dma.done [#allocation6], 16
    $region25: #{_lambda_.1} parent=1 // pred_fallthru
      _
    %p52 = scmp.eq.s32.totalorder 0, 0
    // Predicated region
    $region26: #{_lambda_.1} parent=1 // pred_check
      %p53 = pneg %p52
    $region27: #{_lambda_.1} parent=1 // pred_check_branch
      %55 = sbr.rel (%p53) target = $region29
    $region28: #{_lambda_.1} parent=1 // pred_region
      %v56 = vld [vmem:[#allocation7] sm:$0x1]
      %v58 = vlaneseq
      %v59 = vshrl.u32 %v58, 7
      %v60 = vsub.s32 0, %v59
      %v61 = vrot.slane %v56, %v60
      %63 = vst [vmem:[#allocation8] sm:$0xff] %v61
    $region29: #{_lambda_.1} parent=1 // pred_fallthru
      _
    %v64 = vld [vmem:[#allocation8] sm:$0xff]
    %v65 = vld [vmem:[#allocation2] sm:$0xff]
    %v66 = vld [vmem:[#allocation5] sm:$0xff]
    %v67 = vld [vmem:[#allocation5 + $0x8] sm:$0xff]
    %v68 = vld [vmem:[#allocation5 + $0x10] sm:$0xff]
    %v69 = vld [vmem:[#allocation5 + $0x18] sm:$0xff]
    %v70 = vld [vmem:[#allocation5 + $0x20] sm:$0xff]
    %v71 = vld [vmem:[#allocation5 + $0x28] sm:$0xff]
    %v72 = vld [vmem:[#allocation5 + $0x30] sm:$0xff]
    %v73 = vld [vmem:[#allocation5 + $0x38] sm:$0xff]
    %v74 = vld [vmem:[#allocation5 + $0x40] sm:$0xff]
    %v75 = vld [vmem:[#allocation5 + $0x48] sm:$0xff]
    %v76 = vld [vmem:[#allocation5 + $0x50] sm:$0xff]
    %v77 = vld [vmem:[#allocation5 + $0x58] sm:$0xff]
    %v78 = vld [vmem:[#allocation5 + $0x60] sm:$0xff]
    %v79 = vld [vmem:[#allocation5 + $0x68] sm:$0xff]
    %v80 = vld [vmem:[#allocation5 + $0x70] sm:$0xff]
    %v81 = vld [vmem:[#allocation5 + $0x78] sm:$0xff]
    %82 = vmatprep.subr.mxu0 0.0
    %83 = vmatpush1.msra.mxu0 %v66
    %84 = vmatprep.subr.mxu0 0.0
    %85 = vmatpush1.msra.mxu0 %v67
    %86 = vmatprep.subr.mxu0 0.0
    %87 = vmatpush1.msra.mxu0 %v68
    %88 = vmatprep.subr.mxu0 0.0
    %89 = vmatpush1.msra.mxu0 %v69
    %90 = vmatprep.subr.mxu0 0.0
    %91 = vmatpush1.msra.mxu0 %v70
    %92 = vmatprep.subr.mxu0 0.0
    %93 = vmatpush1.msra.mxu0 %v71
    %94 = vmatprep.subr.mxu0 0.0
    %95 = vmatpush1.msra.mxu0 %v72
    %96 = vmatprep.subr.mxu0 0.0
    %97 = vmatpush1.msra.mxu0 %v73
    %98 = vmatprep.subr.mxu0 0.0
    %99 = vmatpush1.msra.mxu0 %v74
    %100 = vmatprep.subr.mxu0 0.0
    %101 = vmatpush1.msra.mxu0 %v75
    %102 = vmatprep.subr.mxu0 0.0
    %103 = vmatpush1.msra.mxu0 %v76
    %104 = vmatprep.subr.mxu0 0.0
    %105 = vmatpush1.msra.mxu0 %v77
    %106 = vmatprep.subr.mxu0 0.0
    %107 = vmatpush1.msra.mxu0 %v78
    %108 = vmatprep.subr.mxu0 0.0
    %109 = vmatpush1.msra.mxu0 %v79
    %110 = vmatprep.subr.mxu0 0.0
    %111 = vmatpush1.msra.mxu0 %v80
    %112 = vmatprep.subr.mxu0 0.0
    %113 = vmatpush1.msra.mxu0 %v81
    %114 = vmatprep.subr.mxu0 0.0
    %115 = vmatpush1.msra.mxu0 0.0
    %116 = vmatprep.subr.mxu0 0.0
    %117 = vmatpush1.msra.mxu0 0.0
    %118 = vmatprep.subr.mxu0 0.0
    %119 = vmatpush1.msra.mxu0 0.0
    %120 = vmatprep.subr.mxu0 0.0
    %121 = vmatpush1.msra.mxu0 0.0
    %122 = vmatprep.subr.mxu0 0.0
    %123 = vmatpush1.msra.mxu0 0.0
    %124 = vmatprep.subr.mxu0 0.0
    %125 = vmatpush1.msra.mxu0 0.0
    %126 = vmatprep.subr.mxu0 0.0
    %127 = vmatpush1.msra.mxu0 0.0
    %128 = vmatprep.subr.mxu0 0.0
    %129 = vmatpush1.msra.mxu0 0.0
    %130 = vmatprep.subr.mxu0 0.0
    %131 = vmatpush1.msra.mxu0 0.0
    %132 = vmatprep.subr.mxu0 0.0
    %133 = vmatpush1.msra.mxu0 0.0
    %134 = vmatprep.subr.mxu0 0.0
    %135 = vmatpush1.msra.mxu0 0.0
    %136 = vmatprep.subr.mxu0 0.0
    %137 = vmatpush1.msra.mxu0 0.0
    %138 = vmatprep.subr.mxu0 0.0
    %139 = vmatpush1.msra.mxu0 0.0
    %140 = vmatprep.subr.mxu0 0.0
    %141 = vmatpush1.msra.mxu0 0.0
    %142 = vmatprep.subr.mxu0 0.0
    %143 = vmatpush1.msra.mxu0 0.0
    %144 = vmatprep.subr.mxu0 0.0
    %145 = vmatpush1.msra.mxu0 0.0
    %146 = vmatprep.mubr.f32.mxu0 0.0
    %147 = vmatmul.mubr.f32.gmra.mrb[0].mxu0 %v65
    %v148 = vpop.f32.mrb[0].mxu0
    %v149 = vadd.f32 0.0, %v148
    %v150 = vpop.f32.mrb[0].mxu0
    %151 = vdwg.mxu0
    %v152 = vadd.f32 %v64, %v149
    %153 = vst [vmem:[#allocation8] sm:$0xff] %v152
    // Predicated region
    $region30: #{_lambda_.1} parent=1 // pred_check
      _
    $region31: #{_lambda_.1} parent=1 // pred_check_branch
      %155 = sbr.rel (0) target = $region33
    $region32: #{_lambda_.1} parent=1 // pred_region
      %s157 = ssub.s32 128, 128
      %158 = vsyncadd [#allocation4], %s157
      %s160 = sshll.u32 [#allocation8], 4
      %s161 = int_to_ptr.vmem [resolvable:$true] %s160
      %163 = dma.vmem_to_hbm [thread:$0]  %s161, 128, %s3, [#allocation4]
    $region33: #{_lambda_.1} parent=1 // pred_fallthru
      _
    // Predicated region
    $region34: #{_lambda_.1} parent=1 // pred_check
      _
    $region35: #{_lambda_.1} parent=1 // pred_check_branch
      %165 = sbr.rel (0) target = $region37
    $region36: #{_lambda_.1} parent=1 // pred_region
      %166 = dma.done [#allocation4], 128
    $region37: #{_lambda_.1} parent=1 // pred_fallthru
      _
    %167 = vsyncpa [#allocation3], 1
    %168 = vsyncpa [#allocation6], 1
    %169 = vsyncpa [#allocation4], 1

</llo_original>
